<compile_context>
chip_gen: v6e
topology: v6e:2x2x1
jax: 0.10.0
libtpu: 0.0.40
codegen_flags: <defaults>
</compile_context>

<pallas_src>
import numpy as np
import jax
import jax.numpy as jnp
from jax.experimental import pallas as pl
from jax.experimental.pallas import tpu as pltpu

# ----------------- synthetic representation structure ------------------------
# TODO(synk): emlp derives multiplicities / reduced indices / canonicalization
# permutation from group representation theory (Rep.canonicalize, Rep.as_dict);
# here they are fixed deterministically with the same shapes/semantics.
B = 8
D_IN = 32                       # x = [4 scalar slots | 7 vector(size-4) slots]
D_OUT = 16
D_W = D_OUT * D_IN              # 512 = flattened weight-matrix size
BATCH_TILE = 128                # lane-dense batch tile (multiple of 128)

_rs = np.random.RandomState(0)


def _make_rep_types():
    # (rep_size r, W multiplicity Wm, nelems n, bids = reduced x indices)
    scalar_ids = np.arange(4).reshape(4, 1)                 # 4 scalar copies in x
    n_s = min(4, 1)
    bids_s = scalar_ids[_rs.choice(4, n_s)].reshape(-1)     # length n_s * 1
    vec_ids = (4 + np.arange(7 * 4)).reshape(7, 4)          # 7 vector(4) copies in x
    n_v = min(7, 4)
    bids_v = vec_ids[_rs.choice(7, n_v)].reshape(-1)        # length n_v * 4
    # W decomposition: 64 scalar copies + 112 vector(4) copies -> 64 + 448 = 512 = D_W
    return [(1, 64, n_s, bids_s), (4, 112, n_v, bids_v)]


REP_TYPES = _make_rep_types()
WDIM = sum(Wm * n for (_, Wm, n, _) in REP_TYPES)           # = 512 (bi_params size)
assert sum(r * Wm for (r, Wm, _, _) in REP_TYPES) == D_W
INV_PERM = _rs.permutation(D_W)   # stand-in for argsort(canonicalization perm)


# ----------------- static params -> M scatter (built once at module init) ----
def _build_scatter_indices():
    """Index arrays s.t. M2_flat.at[flat_pos].add(params[param_idx]) == build."""
    rows, cols, pidx = [], [], []
    off = 0
    col = 0
    for (r, Wm, n, bids) in REP_TYPES:
        for m in range(Wm):
            for k in range(r):
                q = col + m * r + k
                for a in range(n):
                    rows.append(q)
                    cols.append(int(bids[a * r + k]))
                    pidx.append(off + m * n + a)
        off += Wm * n
        col += Wm * r
    rows = np.asarray(rows, np.int64)
    cols = np.asarray(cols, np.int64)
    pidx = np.asarray(pidx, np.int64)
    # M_final = M[INV_PERM]  =>  original row r lands at argsort(INV_PERM)[r]
    final_rows = np.argsort(INV_PERM)[rows]
    flat_pos = final_rows * D_IN + cols
    return flat_pos.astype(np.int32), pidx.astype(np.int32)


_FLAT_POS, _PARAM_IDX = _build_scatter_indices()


def _build_m2(bi_params):
    """bi_params (WDIM,) -> 0.1 * M2, shape (D_OUT, D_IN*D_IN); device-side, jittable."""
    contrib = bi_params.astype(jnp.float32)[_PARAM_IDX]
    m_flat = jnp.zeros((D_W * D_IN,), jnp.float32).at[_FLAT_POS].add(contrib)
    m3 = m_flat.reshape(D_OUT, D_IN, D_IN)         # M3[i, j, k]
    return 0.1 * m3.reshape(D_OUT, D_IN * D_IN)    # fold the 0.1 scale in here


# ----------------- Pallas kernel ---------------------------------------------
def _equiv_bilinear_kernel(m2_ref, xt_ref, ot_ref):
    # m2_ref: (D_OUT, D_IN*D_IN)   -- 0.1 * M2, resident across batch tiles
    # xt_ref: (D_IN, BATCH_TILE)   -- x transposed (features, batch), lane-dense
    # ot_ref: (D_OUT, BATCH_TILE)
    xt = xt_ref[...]
    # Z[j*D_IN + k, b] = x[b, j] * x[b, k]   (VPU broadcast multiply; reshape is
    # a layout no-op since the merged sublane dims are multiples of 8)
    z = (xt[:, None, :] * xt[None, :, :]).reshape(D_IN * D_IN, BATCH_TILE)
    # out[i, b] = sum_{jk} 0.1*M3[i,j,k] * x[b,j] * x[b,k] -- one MXU contraction
    ot_ref[...] = jnp.dot(m2_ref[...], z, preferred_element_type=jnp.float32)


def equiv_bilinear_forward(bi_params, x):
    """Forward pass of EquivBiLinear.  x: (bsz, D_IN) -> (bsz, D_OUT)."""
    assert x.ndim == 2 and x.shape[-1] == D_IN
    bsz = x.shape[0]
    m2 = _build_m2(bi_params)                                    # (D_OUT, D_IN*D_IN)

    n_tiles = pl.cdiv(bsz, BATCH_TILE)
    bp = n_tiles * BATCH_TILE
    # batch on the lane axis, zero-padded to a multiple of 128 (lane-dense stores)
    xt = jnp.zeros((D_IN, bp), jnp.float32).at[:, :bsz].set(
        jnp.transpose(x.astype(jnp.float32)))

    out_t = pl.pallas_call(
        _equiv_bilinear_kernel,
        out_shape=jax.ShapeDtypeStruct((D_OUT, bp), jnp.float32),
        grid=(n_tiles,),
        in_specs=[
            pl.BlockSpec((D_OUT, D_IN * D_IN), lambda b: (0, 0)),   # stays resident
            pl.BlockSpec((D_IN, BATCH_TILE), lambda b: (0, b)),
        ],
        out_specs=pl.BlockSpec((D_OUT, BATCH_TILE), lambda b: (0, b)),
        compiler_params=pltpu.CompilerParams(
            dimension_semantics=("parallel",)),                     # v7x: 2 TCs
    )(m2, xt)
    return jnp.transpose(out_t[:, :bsz]).astype(x.dtype)            # (bsz, D_OUT)


# ----------------- float64 NumPy reference (direct port of lazy_projection) --
def reference_forward(bi_params, x):
    params = np.asarray(bi_params, np.float64)
    xf = np.asarray(x, np.float64)
    bs = xf.shape[0]
    Ws = []
    off = 0
    for (r, Wm, n, bids) in REP_TYPES:
        P = params[off:off + Wm * n].reshape(Wm, n)
        off += Wm * n
        xsel = xf[:, bids]                              # (bs, n*r)
        elems = P @ xsel.T.reshape(n, r * bs)           # (Wm, r*bs)
        elems = elems.reshape(Wm * r, bs).T             # (bs, Wm*r)
        Ws.append(elems)
    Wcat = np.concatenate(Ws, axis=-1)[:, INV_PERM]     # (bs, D_W)
    W = Wcat.reshape(bs, D_OUT, D_IN)
    return 0.1 * np.einsum('bij,bj->bi', W, xf)


if __name__ == "__main__":
    key = jax.random.PRNGKey(0)
    kp, kx = jax.random.split(key)
    bi_params = jax.random.normal(kp, (WDIM,), dtype=jnp.float32)   # torch.randn(Wdim)
    x = jax.random.normal(kx, (B, D_IN), dtype=jnp.float32)

    fwd = jax.jit(equiv_bilinear_forward)   # fully jittable: no NumPy on the params path
    out = jax.block_until_ready(fwd(bi_params, x))
    ref = reference_forward(bi_params, x)

    assert out.shape == (B, D_OUT), out.shape
    err = float(np.max(np.abs(np.asarray(out, np.float64) - ref)))
    assert np.allclose(np.asarray(out, np.float64), ref, rtol=1e-2, atol=1e-2), err
    print("KERNEL_OK")
</pallas_src>

<mosaic_0001>
module attributes {stable_mosaic.version = 11 : i64} {
  func.func private @main(%arg0: i32) attributes {dimension_semantics = [#tpu.dimension_semantics<core_parallel>], iteration_bounds = array<i64: 2>, tpu.core_type = #tpu.core_type<sc_scalar_subcore>, window_params = []} {
    return
  }
}

module attributes {stable_mosaic.version = 11 : i64} {
  func.func private @main(%arg0: i32) attributes {dimension_semantics = [#tpu.dimension_semantics<core_parallel>], iteration_bounds = array<i64: 2>, tpu.core_type = #tpu.core_type<sc_scalar_subcore>, window_params = []} {
    return
  }
}

module attributes {stable_mosaic.version = 11 : i64} {
  func.func @_equiv_bilinear_kernel(%arg0: i32, %arg1: memref<16x1024xf32, #tpu.memory_space<vmem>>, %arg2: memref<32x128xf32, #tpu.memory_space<vmem>>, %arg3: memref<16x128xf32, #tpu.memory_space<vmem>>) attributes {dimension_semantics = [#tpu.dimension_semantics<parallel>], iteration_bounds = array<i64: 1>, scalar_prefetch = 0 : i64, scratch_operands = 0 : i64, tpu.core_type = #tpu.core_type<tc>, window_params = [{pipeline_mode = #tpu.pipeline_mode<synchronous>, transform_indices = @transform_0, window_bounds = array<i64: 16, 1024>}, {transform_indices = @transform_1, window_bounds = array<i64: 32, 128>}, {transform_indices = @transform_2, window_bounds = array<i64: 16, 128>}]} {
    %c0 = arith.constant 0 : index
    %c0_0 = arith.constant 0 : index
    %0 = vector.load %arg2[%c0, %c0_0] : memref<32x128xf32, #tpu.memory_space<vmem>>, vector<32x128xf32>
    %1 = vector.shape_cast %0 : vector<32x128xf32> to vector<32x1x128xf32>
    %2 = vector.shape_cast %0 : vector<32x128xf32> to vector<1x32x128xf32>
    %3 = vector.broadcast %1 : vector<32x1x128xf32> to vector<32x32x128xf32>
    %4 = vector.broadcast %2 : vector<1x32x128xf32> to vector<32x32x128xf32>
    %5 = arith.mulf %3, %4 : vector<32x32x128xf32>
    %6 = vector.shape_cast %5 : vector<32x32x128xf32> to vector<1024x128xf32>
    %c0_1 = arith.constant 0 : index
    %c0_2 = arith.constant 0 : index
    %7 = vector.load %arg1[%c0_1, %c0_2] : memref<16x1024xf32, #tpu.memory_space<vmem>>, vector<16x1024xf32>
    %cst = arith.constant dense<0.000000e+00> : vector<16x128xf32>
    %8 = tpu.matmul %7, %6, %cst {dimension_numbers = #tpu.dot_dimension_numbers<[1], [0], [0], [1], [0, 0, 1, 1], [], []>} : vector<16x1024xf32>, vector<1024x128xf32>, vector<16x128xf32> -> vector<16x128xf32>
    %c0_3 = arith.constant 0 : index
    %c0_4 = arith.constant 0 : index
    %9 = vector.load %arg3[%c0_3, %c0_4] : memref<16x128xf32, #tpu.memory_space<vmem>>, vector<16x128xf32>
    tpu.vector_store %arg3[%c0_3, %c0_4], %8 {strides = array<i32>} : memref<16x128xf32, #tpu.memory_space<vmem>>, vector<16x128xf32>,
    return
  }
  func.func @transform_0(%arg0: i32) -> (i32, i32) {
    %c0_i32 = arith.constant 0 : i32
    %c0_i32_0 = arith.constant 0 : i32
    %c0_i32_1 = arith.constant 0 : i32
    return %c0_i32, %c0_i32_0 : i32, i32
  }
  func.func @transform_1(%arg0: i32) -> (i32, i32) {
    %c0_i32 = arith.constant 0 : i32
    %c0_i32_0 = arith.constant 0 : i32
    return %c0_i32, %arg0 : i32, i32
  }
  func.func @transform_2(%arg0: i32) -> (i32, i32) {
    %c0_i32 = arith.constant 0 : i32
    %c0_i32_0 = arith.constant 0 : i32
    return %c0_i32, %arg0 : i32, i32
  }
}

</mosaic_0001>

<llo_original>
// kernel: equiv_bilinear_forward.1
$region0: #{equiv_bilinear_forward.1}
  #allocation0 [shape = 'u32[]', space=smem, size = 0x4, offset = 0x4, fixed_abs, tag = 'smem constant byte address 0x4 - core index']
  #allocation1 [shape = 'u32[144,128]{1,0:T(1,128)}', space=vmem, size = 0x12000, scoped, tag = 'internal scratch']
  %s0 = inlined_call_operand.vmem [shape: f32[16,1024], index: 0, kind: input, shape index: {}]
  %s1 = inlined_call_operand.vmem [shape: f32[32,128], index: 1, kind: input, shape index: {}]
  %s2 = inlined_call_operand.vmem [shape: f32[16,128], index: 2, kind: output, shape index: {}]
  %s3 = sld [smem:[#allocation0]]
  $region18: #{equiv_bilinear_forward.1} parent=0
    _
  %s5 = ssub.s32 1, %s3
  %s6 = scalar_select 0, %s5, %s3
  // Predicated region
  $region2: #{equiv_bilinear_forward.1} parent=0 // pred_check
    _
  $region3: #{equiv_bilinear_forward.1} parent=0 // pred_check_branch
    %8 = sbr.rel (0) target = $region5
  $region4: #{equiv_bilinear_forward.1} parent=0 // pred_region
    _
  $region5: #{equiv_bilinear_forward.1} parent=0 // pred_fallthru
    _
  // Predicated region
  $region6: #{equiv_bilinear_forward.1} parent=0 // pred_check
    _
  $region7: #{equiv_bilinear_forward.1} parent=0 // pred_check_branch
    %10 = sbr.rel (0) target = $region9
  $region8: #{equiv_bilinear_forward.1} parent=0 // pred_region
    _
  $region9: #{equiv_bilinear_forward.1} parent=0 // pred_fallthru
    _
  %v11 = vld [vmem:[%s1] sm:$0xff]
  %v12 = vld [vmem:[%s1 + $0x8] sm:$0xff]
  %v13 = vld [vmem:[%s1 + $0x10] sm:$0xff]
  %v14 = vld [vmem:[%s1 + $0x18] sm:$0xff]
  %v19 = vcombine.high %v11, %v11
  %v21 = vunpack.c.l.s4 1966171168
  %v22 = vunpack.c.0.s8 %v21
  %v23 = vlaneseq
  %v24 = vshrl.u32 %v23, 7
  %v25 = vsub.s32 %v22, %v24
  %v26 = vrot.slane %v11, %v25
  %v28 = vunpack.c.l.s4 1966171168
  %v29 = vunpack.c.0.s8 %v28
  %v30 = vlaneseq
  %v31 = vshrl.u32 %v30, 7
  %v32 = vsub.s32 %v29, %v31
  %v33 = vrot.slane %v19, %v32
  %v34 = vcombine.high %v26, %v26
  %v35 = vcombine.high %v33, %v33
  %v37 = vunpack.c.l.s4 1966171168
  %v38 = vunpack.c.0.s8 %v37
  %v39 = vlaneseq
  %v40 = vshrl.u32 %v39, 7
  %v41 = vsub.s32 %v38, %v40
  %v42 = vrot.slane %v26, %v41
  %v44 = vunpack.c.l.s4 1966171168
  %v45 = vunpack.c.0.s8 %v44
  %v46 = vlaneseq
  %v47 = vshrl.u32 %v46, 7
  %v48 = vsub.s32 %v45, %v47
  %v49 = vrot.slane %v33, %v48
  %v51 = vunpack.c.l.s4 1966171168
  %v52 = vunpack.c.0.s8 %v51
  %v53 = vlaneseq
  %v54 = vshrl.u32 %v53, 7
  %v55 = vsub.s32 %v52, %v54
  %v56 = vrot.slane %v34, %v55
  %v58 = vunpack.c.l.s4 1966171168
  %v59 = vunpack.c.0.s8 %v58
  %v60 = vlaneseq
  %v61 = vshrl.u32 %v60, 7
  %v62 = vsub.s32 %v59, %v61
  %v63 = vrot.slane %v35, %v62
  %v64 = vcombine.high %v42, %v42
  %v65 = vcombine.high %v49, %v49
  %v66 = vcombine.high %v56, %v56
  %v67 = vcombine.high %v63, %v63
  %v68 = vcombine.high %v12, %v12
  %v70 = vunpack.c.l.s4 1966171168
  %v71 = vunpack.c.0.s8 %v70
  %v72 = vlaneseq
  %v73 = vshrl.u32 %v72, 7
  %v74 = vsub.s32 %v71, %v73
  %v75 = vrot.slane %v12, %v74
  %v77 = vunpack.c.l.s4 1966171168
  %v78 = vunpack.c.0.s8 %v77
  %v79 = vlaneseq
  %v80 = vshrl.u32 %v79, 7
  %v81 = vsub.s32 %v78, %v80
  %v82 = vrot.slane %v68, %v81
  %v83 = vcombine.high %v75, %v75
  %v84 = vcombine.high %v82, %v82
  %v86 = vunpack.c.l.s4 1966171168
  %v87 = vunpack.c.0.s8 %v86
  %v88 = vlaneseq
  %v89 = vshrl.u32 %v88, 7
  %v90 = vsub.s32 %v87, %v89
  %v91 = vrot.slane %v75, %v90
  %v93 = vunpack.c.l.s4 1966171168
  %v94 = vunpack.c.0.s8 %v93
  %v95 = vlaneseq
  %v96 = vshrl.u32 %v95, 7
  %v97 = vsub.s32 %v94, %v96
  %v98 = vrot.slane %v82, %v97
  %v100 = vunpack.c.l.s4 1966171168
  %v101 = vunpack.c.0.s8 %v100
  %v102 = vlaneseq
  %v103 = vshrl.u32 %v102, 7
  %v104 = vsub.s32 %v101, %v103
  %v105 = vrot.slane %v83, %v104
  %v107 = vunpack.c.l.s4 1966171168
  %v108 = vunpack.c.0.s8 %v107
  %v109 = vlaneseq
  %v110 = vshrl.u32 %v109, 7
  %v111 = vsub.s32 %v108, %v110
  %v112 = vrot.slane %v84, %v111
  %v113 = vcombine.high %v91, %v91
  %v114 = vcombine.high %v98, %v98
  %v115 = vcombine.high %v105, %v105
  %v116 = vcombine.high %v112, %v112
  %v117 = vcombine.high %v13, %v13
  %v119 = vunpack.c.l.s4 1966171168
  %v120 = vunpack.c.0.s8 %v119
  %v121 = vlaneseq
  %v122 = vshrl.u32 %v121, 7
  %v123 = vsub.s32 %v120, %v122
  %v124 = vrot.slane %v13, %v123
  %v126 = vunpack.c.l.s4 1966171168
  %v127 = vunpack.c.0.s8 %v126
  %v128 = vlaneseq
  %v129 = vshrl.u32 %v128, 7
  %v130 = vsub.s32 %v127, %v129
  %v131 = vrot.slane %v117, %v130
  %v132 = vcombine.high %v124, %v124
  %v133 = vcombine.high %v131, %v131
  %v135 = vunpack.c.l.s4 1966171168
  %v136 = vunpack.c.0.s8 %v135
  %v137 = vlaneseq
  %v138 = vshrl.u32 %v137, 7
  %v139 = vsub.s32 %v136, %v138
  %v140 = vrot.slane %v124, %v139
  %v142 = vunpack.c.l.s4 1966171168
  %v143 = vunpack.c.0.s8 %v142
  %v144 = vlaneseq
  %v145 = vshrl.u32 %v144, 7
  %v146 = vsub.s32 %v143, %v145
  %v147 = vrot.slane %v131, %v146
  %v149 = vunpack.c.l.s4 1966171168
  %v150 = vunpack.c.0.s8 %v149
  %v151 = vlaneseq
  %v152 = vshrl.u32 %v151, 7
  %v153 = vsub.s32 %v150, %v152
  %v154 = vrot.slane %v132, %v153
  %v156 = vunpack.c.l.s4 1966171168
  %v157 = vunpack.c.0.s8 %v156
  %v158 = vlaneseq
  %v159 = vshrl.u32 %v158, 7
  %v160 = vsub.s32 %v157, %v159
  %v161 = vrot.slane %v133, %v160
  %v162 = vcombine.high %v140, %v140
  %v163 = vcombine.high %v147, %v147
  %v164 = vcombine.high %v154, %v154
  %v165 = vcombine.high %v161, %v161
  %v166 = vcombine.high %v14, %v14
  %v168 = vunpack.c.l.s4 1966171168
  %v169 = vunpack.c.0.s8 %v168
  %v170 = vlaneseq
  %v171 = vshrl.u32 %v170, 7
  %v172 = vsub.s32 %v169, %v171
  %v173 = vrot.slane %v14, %v172
  %v175 = vunpack.c.l.s4 1966171168
  %v176 = vunpack.c.0.s8 %v175
  %v177 = vlaneseq
  %v178 = vshrl.u32 %v177, 7
  %v179 = vsub.s32 %v176, %v178
  %v180 = vrot.slane %v166, %v179
  %v181 = vcombine.high %v173, %v173
  %v182 = vcombine.high %v180, %v180
  %v184 = vunpack.c.l.s4 1966171168
  %v185 = vunpack.c.0.s8 %v184
  %v186 = vlaneseq
  %v187 = vshrl.u32 %v186, 7
  %v188 = vsub.s32 %v185, %v187
  %v189 = vrot.slane %v173, %v188
  %v191 = vunpack.c.l.s4 1966171168
  %v192 = vunpack.c.0.s8 %v191
  %v193 = vlaneseq
  %v194 = vshrl.u32 %v193, 7
  %v195 = vsub.s32 %v192, %v194
  %v196 = vrot.slane %v180, %v195
  %v198 = vunpack.c.l.s4 1966171168
  %v199 = vunpack.c.0.s8 %v198
  %v200 = vlaneseq
  %v201 = vshrl.u32 %v200, 7
  %v202 = vsub.s32 %v199, %v201
  %v203 = vrot.slane %v181, %v202
  %v205 = vunpack.c.l.s4 1966171168
  %v206 = vunpack.c.0.s8 %v205
  %v207 = vlaneseq
  %v208 = vshrl.u32 %v207, 7
  %v209 = vsub.s32 %v206, %v208
  %v210 = vrot.slane %v182, %v209
  %v211 = vcombine.high %v189, %v189
  %v212 = vcombine.high %v196, %v196
  %v213 = vcombine.high %v203, %v203
  %v214 = vcombine.high %v210, %v210
  %v215 = vlaneseq
  %v216 = vshrl.u32 %v215, 7
  %v217 = vsub.s32 0, %v216
  %v218 = vrot.slane %v42, %v217
  %v219 = vlaneseq
  %v220 = vshrl.u32 %v219, 7
  %v221 = vsub.s32 0, %v220
  %v222 = vrot.slane %v56, %v221
  %v223 = vlaneseq
  %v224 = vshrl.u32 %v223, 7
  %v225 = vsub.s32 0, %v224
  %v226 = vrot.slane %v64, %v225
  %v227 = vlaneseq
  %v228 = vshrl.u32 %v227, 7
  %v229 = vsub.s32 0, %v228
  %v230 = vrot.slane %v66, %v229
  %v231 = vlaneseq
  %v232 = vshrl.u32 %v231, 7
  %v233 = vsub.s32 0, %v232
  %v234 = vrot.slane %v49, %v233
  %v235 = vlaneseq
  %v236 = vshrl.u32 %v235, 7
  %v237 = vsub.s32 0, %v236
  %v238 = vrot.slane %v63, %v237
  %v239 = vlaneseq
  %v240 = vshrl.u32 %v239, 7
  %v241 = vsub.s32 0, %v240
  %v242 = vrot.slane %v65, %v241
  %v243 = vlaneseq
  %v244 = vshrl.u32 %v243, 7
  %v245 = vsub.s32 0, %v244
  %v246 = vrot.slane %v67, %v245
  %v247 = vlaneseq
  %v248 = vshrl.u32 %v247, 7
  %v249 = vsub.s32 0, %v248
  %v250 = vrot.slane %v91, %v249
  %v251 = vlaneseq
  %v252 = vshrl.u32 %v251, 7
  %v253 = vsub.s32 0, %v252
  %v254 = vrot.slane %v105, %v253
  %v255 = vlaneseq
  %v256 = vshrl.u32 %v255, 7
  %v257 = vsub.s32 0, %v256
  %v258 = vrot.slane %v113, %v257
  %v259 = vlaneseq
  %v260 = vshrl.u32 %v259, 7
  %v261 = vsub.s32 0, %v260
  %v262 = vrot.slane %v115, %v261
  %v263 = vlaneseq
  %v264 = vshrl.u32 %v263, 7
  %v265 = vsub.s32 0, %v264
  %v266 = vrot.slane %v98, %v265
  %v267 = vlaneseq
  %v268 = vshrl.u32 %v267, 7
  %v269 = vsub.s32 0, %v268
  %v270 = vrot.slane %v112, %v269
  %v271 = vlaneseq
  %v272 = vshrl.u32 %v271, 7
  %v273 = vsub.s32 0, %v272
  %v274 = vrot.slane %v114, %v273
  %v275 = vlaneseq
  %v276 = vshrl.u32 %v275, 7
  %v277 = vsub.s32 0, %v276
  %v278 = vrot.slane %v116, %v277
  %v279 = vlaneseq
  %v280 = vshrl.u32 %v279, 7
  %v281 = vsub.s32 0, %v280
  %v282 = vrot.slane %v140, %v281
  %v283 = vlaneseq
  %v284 = vshrl.u32 %v283, 7
  %v285 = vsub.s32 0, %v284
  %v286 = vrot.slane %v154, %v285
  %v287 = vlaneseq
  %v288 = vshrl.u32 %v287, 7
  %v289 = vsub.s32 0, %v288
  %v290 = vrot.slane %v162, %v289
  %v291 = vlaneseq
  %v292 = vshrl.u32 %v291, 7
  %v293 = vsub.s32 0, %v292
  %v294 = vrot.slane %v164, %v293
  %v295 = vlaneseq
  %v296 = vshrl.u32 %v295, 7
  %v297 = vsub.s32 0, %v296
  %v298 = vrot.slane %v147, %v297
  %v299 = vlaneseq
  %v300 = vshrl.u32 %v299, 7
  %v301 = vsub.s32 0, %v300
  %v302 = vrot.slane %v161, %v301
  %v303 = vlaneseq
  %v304 = vshrl.u32 %v303, 7
  %v305 = vsub.s32 0, %v304
  %v306 = vrot.slane %v163, %v305
  %v307 = vlaneseq
  %v308 = vshrl.u32 %v307, 7
  %v309 = vsub.s32 0, %v308
  %v310 = vrot.slane %v165, %v309
  %v311 = vlaneseq
  %v312 = vshrl.u32 %v311, 7
  %v313 = vsub.s32 0, %v312
  %v314 = vrot.slane %v189, %v313
  %v315 = vlaneseq
  %v316 = vshrl.u32 %v315, 7
  %v317 = vsub.s32 0, %v316
  %v318 = vrot.slane %v203, %v317
  %v319 = vlaneseq
  %v320 = vshrl.u32 %v319, 7
  %v321 = vsub.s32 0, %v320
  %v322 = vrot.slane %v211, %v321
  %v323 = vlaneseq
  %v324 = vshrl.u32 %v323, 7
  %v325 = vsub.s32 0, %v324
  %v326 = vrot.slane %v213, %v325
  %v327 = vlaneseq
  %v328 = vshrl.u32 %v327, 7
  %v329 = vsub.s32 0, %v328
  %v330 = vrot.slane %v196, %v329
  %v331 = vlaneseq
  %v332 = vshrl.u32 %v331, 7
  %v333 = vsub.s32 0, %v332
  %v334 = vrot.slane %v210, %v333
  %v335 = vlaneseq
  %v336 = vshrl.u32 %v335, 7
  %v337 = vsub.s32 0, %v336
  %v338 = vrot.slane %v212, %v337
  %v339 = vlaneseq
  %v340 = vshrl.u32 %v339, 7
  %v341 = vsub.s32 0, %v340
  %v342 = vrot.slane %v214, %v341
  %v375 = vmul.f32 %v218, %v11
  %v376 = vmul.f32 %v218, %v12
  %v377 = vmul.f32 %v218, %v13
  %v378 = vmul.f32 %v218, %v14
  %v379 = vmul.f32 %v222, %v11
  %v380 = vmul.f32 %v222, %v12
  %v381 = vmul.f32 %v222, %v13
  %v382 = vmul.f32 %v222, %v14
  %v383 = vmul.f32 %v226, %v11
  %v384 = vmul.f32 %v226, %v12
  %v385 = vmul.f32 %v226, %v13
  %v386 = vmul.f32 %v226, %v14
  %v387 = vmul.f32 %v230, %v11
  %v388 = vmul.f32 %v230, %v12
  %v389 = vmul.f32 %v230, %v13
  %v390 = vmul.f32 %v230, %v14
  %v391 = vmul.f32 %v234, %v11
  %v392 = vmul.f32 %v234, %v12
  %v393 = vmul.f32 %v234, %v13
  %v394 = vmul.f32 %v234, %v14
  %v395 = vmul.f32 %v238, %v11
  %v396 = vmul.f32 %v238, %v12
  %v397 = vmul.f32 %v238, %v13
  %v398 = vmul.f32 %v238, %v14
  %v399 = vmul.f32 %v242, %v11
  %v400 = vmul.f32 %v242, %v12
  %v401 = vmul.f32 %v242, %v13
  %v402 = vmul.f32 %v242, %v14
  %v403 = vmul.f32 %v246, %v11
  %v404 = vmul.f32 %v246, %v12
  %v405 = vmul.f32 %v246, %v13
  %v406 = vmul.f32 %v246, %v14
  %v407 = vmul.f32 %v250, %v11
  %v408 = vmul.f32 %v250, %v12
  %v409 = vmul.f32 %v250, %v13
  %v410 = vmul.f32 %v250, %v14
  %v411 = vmul.f32 %v254, %v11
  %v412 = vmul.f32 %v254, %v12
  %v413 = vmul.f32 %v254, %v13
  %v414 = vmul.f32 %v254, %v14
  %v415 = vmul.f32 %v258, %v11
  %v416 = vmul.f32 %v258, %v12
  %v417 = vmul.f32 %v258, %v13
  %v418 = vmul.f32 %v258, %v14
  %v419 = vmul.f32 %v262, %v11
  %v420 = vmul.f32 %v262, %v12
  %v421 = vmul.f32 %v262, %v13
  %v422 = vmul.f32 %v262, %v14
  %v423 = vmul.f32 %v266, %v11
  %v424 = vmul.f32 %v266, %v12
  %v425 = vmul.f32 %v266, %v13
  %v426 = vmul.f32 %v266, %v14
  %v427 = vmul.f32 %v270, %v11
  %v428 = vmul.f32 %v270, %v12
  %v429 = vmul.f32 %v270, %v13
  %v430 = vmul.f32 %v270, %v14
  %v431 = vmul.f32 %v274, %v11
  %v432 = vmul.f32 %v274, %v12
  %v433 = vmul.f32 %v274, %v13
  %v434 = vmul.f32 %v274, %v14
  %v435 = vmul.f32 %v278, %v11
  %v436 = vmul.f32 %v278, %v12
  %v437 = vmul.f32 %v278, %v13
  %v438 = vmul.f32 %v278, %v14
  %v439 = vmul.f32 %v282, %v11
  %v440 = vmul.f32 %v282, %v12
  %v441 = vmul.f32 %v282, %v13
  %v442 = vmul.f32 %v282, %v14
  %v443 = vmul.f32 %v286, %v11
  %v444 = vmul.f32 %v286, %v12
  %v445 = vmul.f32 %v286, %v13
  %v446 = vmul.f32 %v286, %v14
  %v447 = vmul.f32 %v290, %v11
  %v448 = vmul.f32 %v290, %v12
  %v449 = vmul.f32 %v290, %v13
  %v450 = vmul.f32 %v290, %v14
  %v451 = vmul.f32 %v294, %v11
  %v452 = vmul.f32 %v294, %v12
  %v453 = vmul.f32 %v294, %v13
  %v454 = vmul.f32 %v294, %v14
  %v455 = vmul.f32 %v298, %v11
  %v456 = vmul.f32 %v298, %v12
  %v457 = vmul.f32 %v298, %v13
  %v458 = vmul.f32 %v298, %v14
  %v459 = vmul.f32 %v302, %v11
  %v460 = vmul.f32 %v302, %v12
  %v461 = vmul.f32 %v302, %v13
  %v462 = vmul.f32 %v302, %v14
  %v463 = vmul.f32 %v306, %v11
  %v464 = vmul.f32 %v306, %v12
  %v465 = vmul.f32 %v306, %v13
  %v466 = vmul.f32 %v306, %v14
  %v467 = vmul.f32 %v310, %v11
  %v468 = vmul.f32 %v310, %v12
  %v469 = vmul.f32 %v310, %v13
  %v470 = vmul.f32 %v310, %v14
  %v471 = vmul.f32 %v314, %v11
  %v472 = vmul.f32 %v314, %v12
  %v473 = vmul.f32 %v314, %v13
  %v474 = vmul.f32 %v314, %v14
  %v475 = vmul.f32 %v318, %v11
  %v476 = vmul.f32 %v318, %v12
  %v477 = vmul.f32 %v318, %v13
  %v478 = vmul.f32 %v318, %v14
  %v479 = vmul.f32 %v322, %v11
  %v480 = vmul.f32 %v322, %v12
  %v481 = vmul.f32 %v322, %v13
  %v482 = vmul.f32 %v322, %v14
  %v483 = vmul.f32 %v326, %v11
  %v484 = vmul.f32 %v326, %v12
  %v485 = vmul.f32 %v326, %v13
  %v486 = vmul.f32 %v326, %v14
  %v487 = vmul.f32 %v330, %v11
  %v488 = vmul.f32 %v330, %v12
  %v489 = vmul.f32 %v330, %v13
  %v490 = vmul.f32 %v330, %v14
  %v491 = vmul.f32 %v334, %v11
  %v492 = vmul.f32 %v334, %v12
  %v493 = vmul.f32 %v334, %v13
  %v494 = vmul.f32 %v334, %v14
  %v495 = vmul.f32 %v338, %v11
  %v496 = vmul.f32 %v338, %v12
  %v497 = vmul.f32 %v338, %v13
  %v498 = vmul.f32 %v338, %v14
  %v499 = vmul.f32 %v342, %v11
  %v500 = vmul.f32 %v342, %v12
  %v501 = vmul.f32 %v342, %v13
  %v502 = vmul.f32 %v342, %v14
  %v503 = vld [vmem:[%s0] sm:$0xff]
  %v504 = vld [vmem:[%s0 + $0x8] sm:$0xff]
  %v505 = vld [vmem:[%s0 + $0x10] sm:$0xff]
  %v506 = vld [vmem:[%s0 + $0x18] sm:$0xff]
  %v507 = vld [vmem:[%s0 + $0x20] sm:$0xff]
  %v508 = vld [vmem:[%s0 + $0x28] sm:$0xff]
  %v509 = vld [vmem:[%s0 + $0x30] sm:$0xff]
  %v510 = vld [vmem:[%s0 + $0x38] sm:$0xff]
  %v511 = vld [vmem:[%s0 + $0x40] sm:$0xff]
  %v512 = vld [vmem:[%s0 + $0x48] sm:$0xff]
  %v513 = vld [vmem:[%s0 + $0x50] sm:$0xff]
  %v514 = vld [vmem:[%s0 + $0x58] sm:$0xff]
  %v515 = vld [vmem:[%s0 + $0x60] sm:$0xff]
  %v516 = vld [vmem:[%s0 + $0x68] sm:$0xff]
  %v517 = vld [vmem:[%s0 + $0x70] sm:$0xff]
  %v518 = vld [vmem:[%s0 + $0x78] sm:$0xff]
  %519 = vmatprep.subr.mxu0 0.0
  %520 = vmatpush1.msra.mxu0 %v390
  %521 = vmatprep.subr.mxu0 0.0
  %522 = vmatpush1.msra.mxu0 %v389
  %523 = vmatprep.subr.mxu0 0.0
  %524 = vmatpush1.msra.mxu0 %v388
  %525 = vmatprep.subr.mxu0 0.0
  %526 = vmatpush1.msra.mxu0 %v387
  %527 = vmatprep.subr.mxu0 0.0
  %528 = vmatpush1.msra.mxu0 %v386
  %529 = vmatprep.subr.mxu0 0.0
  %530 = vmatpush1.msra.mxu0 %v385
  %531 = vmatprep.subr.mxu0 0.0
  %532 = vmatpush1.msra.mxu0 %v384
  %533 = vmatprep.subr.mxu0 0.0
  %534 = vmatpush1.msra.mxu0 %v383
  %535 = vmatprep.subr.mxu0 0.0
  %536 = vmatpush1.msra.mxu0 %v382
  %537 = vmatprep.subr.mxu0 0.0
  %538 = vmatpush1.msra.mxu0 %v381
  %539 = vmatprep.subr.mxu0 0.0
  %540 = vmatpush1.msra.mxu0 %v380
  %541 = vmatprep.subr.mxu0 0.0
  %542 = vmatpush1.msra.mxu0 %v379
  %543 = vmatprep.subr.mxu0 0.0
  %544 = vmatpush1.msra.mxu0 %v378
  %545 = vmatprep.subr.mxu0 0.0
  %546 = vmatpush1.msra.mxu0 %v377
  %547 = vmatprep.subr.mxu0 0.0
  %548 = vmatpush1.msra.mxu0 %v376
  %549 = vmatprep.subr.mxu0 0.0
  %550 = vmatpush1.msra.mxu0 %v375
  %551 = vmatprep.subr.mxu0 0.0
  %552 = vmatpush2.msra.mxu0 %v406
  %553 = vmatprep.subr.mxu0 0.0
  %554 = vmatpush2.msra.mxu0 %v405
  %555 = vmatprep.subr.mxu0 0.0
  %556 = vmatpush2.msra.mxu0 %v404
  %557 = vmatprep.subr.mxu0 0.0
  %558 = vmatpush2.msra.mxu0 %v403
  %559 = vmatprep.subr.mxu0 0.0
  %560 = vmatpush2.msra.mxu0 %v402
  %561 = vmatprep.subr.mxu0 0.0
  %562 = vmatpush2.msra.mxu0 %v401
  %563 = vmatprep.subr.mxu0 0.0
  %564 = vmatpush2.msra.mxu0 %v400
  %565 = vmatprep.subr.mxu0 0.0
  %566 = vmatpush2.msra.mxu0 %v399
  %567 = vmatprep.subr.mxu0 0.0
  %568 = vmatpush2.msra.mxu0 %v398
  %569 = vmatprep.subr.mxu0 0.0
  %570 = vmatpush2.msra.mxu0 %v397
  %571 = vmatprep.subr.mxu0 0.0
  %572 = vmatpush2.msra.mxu0 %v396
  %573 = vmatprep.subr.mxu0 0.0
  %574 = vmatpush2.msra.mxu0 %v395
  %575 = vmatprep.subr.mxu0 0.0
  %576 = vmatpush2.msra.mxu0 %v394
  %577 = vmatprep.subr.mxu0 0.0
  %578 = vmatpush2.msra.mxu0 %v393
  %579 = vmatprep.subr.mxu0 0.0
  %580 = vmatpush2.msra.mxu0 %v392
  %581 = vmatprep.subr.mxu0 0.0
  %582 = vmatpush2.msra.mxu0 %v391
  %583 = vmatprep.mubr.f32.mxu0 %v504
  %584 = vmatmul.mubr.f32.gmra.mxu0 %v503
  %v585 = vpop.f32.mrf.mxu0
  %v586 = vadd.f32 0.0, %v585
  %v587 = vpop.f32.mrf.mxu0
  %588 = vmatprep.mubr.f32.mxu0 %v512
  %589 = vmatmul.mubr.f32.gmra.mxu0 %v511
  %v590 = vpop.f32.mrf.mxu0
  %v591 = vadd.f32 0.0, %v590
  %v592 = vpop.f32.mrf.mxu0
  %593 = vdwg.mxu0
  %594 = vmatprep.subr.mxu0 0.0
  %595 = vmatpush1.msra.mxu0 %v422
  %596 = vmatprep.subr.mxu0 0.0
  %597 = vmatpush1.msra.mxu0 %v421
  %598 = vmatprep.subr.mxu0 0.0
  %599 = vmatpush1.msra.mxu0 %v420
  %600 = vmatprep.subr.mxu0 0.0
  %601 = vmatpush1.msra.mxu0 %v419
  %602 = vmatprep.subr.mxu0 0.0
  %603 = vmatpush1.msra.mxu0 %v418
  %604 = vmatprep.subr.mxu0 0.0
  %605 = vmatpush1.msra.mxu0 %v417
  %606 = vmatprep.subr.mxu0 0.0
  %607 = vmatpush1.msra.mxu0 %v416
  %608 = vmatprep.subr.mxu0 0.0
  %609 = vmatpush1.msra.mxu0 %v415
  %610 = vmatprep.subr.mxu0 0.0
  %611 = vmatpush1.msra.mxu0 %v414
  %612 = vmatprep.subr.mxu0 0.0
  %613 = vmatpush1.msra.mxu0 %v413
  %614 = vmatprep.subr.mxu0 0.0
  %615 = vmatpush1.msra.mxu0 %v412
  %616 = vmatprep.subr.mxu0 0.0
  %617 = vmatpush1.msra.mxu0 %v411
  %618 = vmatprep.subr.mxu0 0.0
  %619 = vmatpush1.msra.mxu0 %v410
  %620 = vmatprep.subr.mxu0 0.0
  %621 = vmatpush1.msra.mxu0 %v409
  %622 = vmatprep.subr.mxu0 0.0
  %623 = vmatpush1.msra.mxu0 %v408
  %624 = vmatprep.subr.mxu0 0.0
  %625 = vmatpush1.msra.mxu0 %v407
  %626 = vmatprep.subr.mxu0 0.0
  %627 = vmatpush2.msra.mxu0 %v438
  %628 = vmatprep.subr.mxu0 0.0
  %629 = vmatpush2.msra.mxu0 %v437
  %630 = vmatprep.subr.mxu0 0.0
  %631 = vmatpush2.msra.mxu0 %v436
  %632 = vmatprep.subr.mxu0 0.0
  %633 = vmatpush2.msra.mxu0 %v435
  %634 = vmatprep.subr.mxu0 0.0
  %635 = vmatpush2.msra.mxu0 %v434
  %636 = vmatprep.subr.mxu0 0.0
  %637 = vmatpush2.msra.mxu0 %v433
  %638 = vmatprep.subr.mxu0 0.0
  %639 = vmatpush2.msra.mxu0 %v432
  %640 = vmatprep.subr.mxu0 0.0
  %641 = vmatpush2.msra.mxu0 %v431
  %642 = vmatprep.subr.mxu0 0.0
  %643 = vmatpush2.msra.mxu0 %v430
  %644 = vmatprep.subr.mxu0 0.0
  %645 = vmatpush2.msra.mxu0 %v429
  %646 = vmatprep.subr.mxu0 0.0
  %647 = vmatpush2.msra.mxu0 %v428
  %648 = vmatprep.subr.mxu0 0.0
  %649 = vmatpush2.msra.mxu0 %v427
  %650 = vmatprep.subr.mxu0 0.0
  %651 = vmatpush2.msra.mxu0 %v426
  %652 = vmatprep.subr.mxu0 0.0
  %653 = vmatpush2.msra.mxu0 %v425
  %654 = vmatprep.subr.mxu0 0.0
  %655 = vmatpush2.msra.mxu0 %v424
  %656 = vmatprep.subr.mxu0 0.0
  %657 = vmatpush2.msra.mxu0 %v423
  %658 = vmatprep.mubr.f32.mxu0 %v506
  %659 = vmatmul.mubr.f32.gmra.mxu0 %v505
  %v660 = vpop.f32.mrf.mxu0
  %v661 = vadd.f32 %v586, %v660
  %v662 = vpop.f32.mrf.mxu0
  %663 = vmatprep.mubr.f32.mxu0 %v514
  %664 = vmatmul.mubr.f32.gmra.mxu0 %v513
  %v665 = vpop.f32.mrf.mxu0
  %v666 = vadd.f32 %v591, %v665
  %v667 = vpop.f32.mrf.mxu0
  %668 = vdwg.mxu0
  %669 = vmatprep.subr.mxu0 0.0
  %670 = vmatpush1.msra.mxu0 %v454
  %671 = vmatprep.subr.mxu0 0.0
  %672 = vmatpush1.msra.mxu0 %v453
  %673 = vmatprep.subr.mxu0 0.0
  %674 = vmatpush1.msra.mxu0 %v452
  %675 = vmatprep.subr.mxu0 0.0
  %676 = vmatpush1.msra.mxu0 %v451
  %677 = vmatprep.subr.mxu0 0.0
  %678 = vmatpush1.msra.mxu0 %v450
  %679 = vmatprep.subr.mxu0 0.0
  %680 = vmatpush1.msra.mxu0 %v449
  %681 = vmatprep.subr.mxu0 0.0
  %682 = vmatpush1.msra.mxu0 %v448
  %683 = vmatprep.subr.mxu0 0.0
  %684 = vmatpush1.msra.mxu0 %v447
  %685 = vmatprep.subr.mxu0 0.0
  %686 = vmatpush1.msra.mxu0 %v446
  %687 = vmatprep.subr.mxu0 0.0
  %688 = vmatpush1.msra.mxu0 %v445
  %689 = vmatprep.subr.mxu0 0.0
  %690 = vmatpush1.msra.mxu0 %v444
  %691 = vmatprep.subr.mxu0 0.0
  %692 = vmatpush1.msra.mxu0 %v443
  %693 = vmatprep.subr.mxu0 0.0
  %694 = vmatpush1.msra.mxu0 %v442
  %695 = vmatprep.subr.mxu0 0.0
  %696 = vmatpush1.msra.mxu0 %v441
  %697 = vmatprep.subr.mxu0 0.0
  %698 = vmatpush1.msra.mxu0 %v440
  %699 = vmatprep.subr.mxu0 0.0
  %700 = vmatpush1.msra.mxu0 %v439
  %701 = vmatprep.subr.mxu0 0.0
  %702 = vmatpush2.msra.mxu0 %v470
  %703 = vmatprep.subr.mxu0 0.0
  %704 = vmatpush2.msra.mxu0 %v469
  %705 = vmatprep.subr.mxu0 0.0
  %706 = vmatpush2.msra.mxu0 %v468
  %707 = vmatprep.subr.mxu0 0.0
  %708 = vmatpush2.msra.mxu0 %v467
  %709 = vmatprep.subr.mxu0 0.0
  %710 = vmatpush2.msra.mxu0 %v466
  %711 = vmatprep.subr.mxu0 0.0
  %712 = vmatpush2.msra.mxu0 %v465
  %713 = vmatprep.subr.mxu0 0.0
  %714 = vmatpush2.msra.mxu0 %v464
  %715 = vmatprep.subr.mxu0 0.0
  %716 = vmatpush2.msra.mxu0 %v463
  %717 = vmatprep.subr.mxu0 0.0
  %718 = vmatpush2.msra.mxu0 %v462
  %719 = vmatprep.subr.mxu0 0.0
  %720 = vmatpush2.msra.mxu0 %v461
  %721 = vmatprep.subr.mxu0 0.0
  %722 = vmatpush2.msra.mxu0 %v460
  %723 = vmatprep.subr.mxu0 0.0
  %724 = vmatpush2.msra.mxu0 %v459
  %725 = vmatprep.subr.mxu0 0.0
  %726 = vmatpush2.msra.mxu0 %v458
  %727 = vmatprep.subr.mxu0 0.0
  %728 = vmatpush2.msra.mxu0 %v457
  %729 = vmatprep.subr.mxu0 0.0
  %730 = vmatpush2.msra.mxu0 %v456
  %731 = vmatprep.subr.mxu0 0.0
  %732 = vmatpush2.msra.mxu0 %v455
  %733 = vmatprep.mubr.f32.mxu0 %v508
  %734 = vmatmul.mubr.f32.gmra.mxu0 %v507
  %v735 = vpop.f32.mrf.mxu0
  %v736 = vadd.f32 %v661, %v735
  %v737 = vpop.f32.mrf.mxu0
  %738 = vmatprep.mubr.f32.mxu0 %v516
  %739 = vmatmul.mubr.f32.gmra.mxu0 %v515
  %v740 = vpop.f32.mrf.mxu0
  %v741 = vadd.f32 %v666, %v740
  %v742 = vpop.f32.mrf.mxu0
  %743 = vdwg.mxu0
  %744 = vmatprep.subr.mxu0 0.0
  %745 = vmatpush1.msra.mxu0 %v486
  %746 = vmatprep.subr.mxu0 0.0
  %747 = vmatpush1.msra.mxu0 %v485
  %748 = vmatprep.subr.mxu0 0.0
  %749 = vmatpush1.msra.mxu0 %v484
  %750 = vmatprep.subr.mxu0 0.0
  %751 = vmatpush1.msra.mxu0 %v483
  %752 = vmatprep.subr.mxu0 0.0
  %753 = vmatpush1.msra.mxu0 %v482
  %754 = vmatprep.subr.mxu0 0.0
  %755 = vmatpush1.msra.mxu0 %v481
  %756 = vmatprep.subr.mxu0 0.0
  %757 = vmatpush1.msra.mxu0 %v480
  %758 = vmatprep.subr.mxu0 0.0
  %759 = vmatpush1.msra.mxu0 %v479
  %760 = vmatprep.subr.mxu0 0.0
  %761 = vmatpush1.msra.mxu0 %v478
  %762 = vmatprep.subr.mxu0 0.0
  %763 = vmatpush1.msra.mxu0 %v477
  %764 = vmatprep.subr.mxu0 0.0
  %765 = vmatpush1.msra.mxu0 %v476
  %766 = vmatprep.subr.mxu0 0.0
  %767 = vmatpush1.msra.mxu0 %v475
  %768 = vmatprep.subr.mxu0 0.0
  %769 = vmatpush1.msra.mxu0 %v474
  %770 = vmatprep.subr.mxu0 0.0
  %771 = vmatpush1.msra.mxu0 %v473
  %772 = vmatprep.subr.mxu0 0.0
  %773 = vmatpush1.msra.mxu0 %v472
  %774 = vmatprep.subr.mxu0 0.0
  %775 = vmatpush1.msra.mxu0 %v471
  %776 = vmatprep.subr.mxu0 0.0
  %777 = vmatpush2.msra.mxu0 %v502
  %778 = vmatprep.subr.mxu0 0.0
  %779 = vmatpush2.msra.mxu0 %v501
  %780 = vmatprep.subr.mxu0 0.0
  %781 = vmatpush2.msra.mxu0 %v500
  %782 = vmatprep.subr.mxu0 0.0
  %783 = vmatpush2.msra.mxu0 %v499
  %784 = vmatprep.subr.mxu0 0.0
  %785 = vmatpush2.msra.mxu0 %v498
  %786 = vmatprep.subr.mxu0 0.0
  %787 = vmatpush2.msra.mxu0 %v497
  %788 = vmatprep.subr.mxu0 0.0
  %789 = vmatpush2.msra.mxu0 %v496
  %790 = vmatprep.subr.mxu0 0.0
  %791 = vmatpush2.msra.mxu0 %v495
  %792 = vmatprep.subr.mxu0 0.0
  %793 = vmatpush2.msra.mxu0 %v494
  %794 = vmatprep.subr.mxu0 0.0
  %795 = vmatpush2.msra.mxu0 %v493
  %796 = vmatprep.subr.mxu0 0.0
  %797 = vmatpush2.msra.mxu0 %v492
  %798 = vmatprep.subr.mxu0 0.0
  %799 = vmatpush2.msra.mxu0 %v491
  %800 = vmatprep.subr.mxu0 0.0
  %801 = vmatpush2.msra.mxu0 %v490
  %802 = vmatprep.subr.mxu0 0.0
  %803 = vmatpush2.msra.mxu0 %v489
  %804 = vmatprep.subr.mxu0 0.0
  %805 = vmatpush2.msra.mxu0 %v488
  %806 = vmatprep.subr.mxu0 0.0
  %807 = vmatpush2.msra.mxu0 %v487
  %808 = vmatprep.mubr.f32.mxu0 %v510
  %809 = vmatmul.mubr.f32.gmra.mxu0 %v509
  %v810 = vpop.f32.mrf.mxu0
  %v811 = vadd.f32 %v736, %v810
  %v812 = vpop.f32.mrf.mxu0
  %813 = vmatprep.mubr.f32.mxu0 %v518
  %814 = vmatmul.mubr.f32.gmra.mxu0 %v517
  %v815 = vpop.f32.mrf.mxu0
  %v816 = vadd.f32 %v741, %v815
  %v817 = vpop.f32.mrf.mxu0
  %818 = vdwg.mxu0
  %819 = vst [vmem:[%s2] sm:$0xff] %v811
  %820 = vst [vmem:[%s2 + $0x8] sm:$0xff] %v816
  // Predicated region
  $region10: #{equiv_bilinear_forward.1} parent=0 // pred_check
    _
  $region11: #{equiv_bilinear_forward.1} parent=0 // pred_check_branch
    %822 = sbr.rel (0) target = $region13
  $region12: #{equiv_bilinear_forward.1} parent=0 // pred_region
    _
  $region13: #{equiv_bilinear_forward.1} parent=0 // pred_fallthru
    _
  // Predicated region
  $region14: #{equiv_bilinear_forward.1} parent=0 // pred_check
    _
  $region15: #{equiv_bilinear_forward.1} parent=0 // pred_check_branch
    %824 = sbr.rel (0) target = $region17
  $region16: #{equiv_bilinear_forward.1} parent=0 // pred_region
    _
  $region17: #{equiv_bilinear_forward.1} parent=0 // pred_fallthru
    _

</llo_original>
